<compile_context>
chip_gen: v7x
topology: tpu7x:2x2x1
jax: 0.10.0
libtpu: 0.0.40
codegen_flags: <defaults>
</compile_context>

<pallas_src>
import functools

import jax
import jax.numpy as jnp
from jax.experimental import pallas as pl
from jax.experimental.pallas import tpu as pltpu


def _round_up(n, m):
    return ((n + m - 1) // m) * m


def _sublane_rows(dtype):
    # Rows needed for a sublane-dense (unmasked) output slab per dtype width.
    return {4: 8, 2: 16, 1: 32}.get(jnp.dtype(dtype).itemsize, 8)


def _embed_gather_kernel(idx_ref, w_hbm, out_ref, sems, *, tb, ring):
    """Gather `tb` embedding rows for this grid step via a ring of row DMAs.

    idx_ref : (N_pad,) int32 in SMEM (scalar prefetch) - flattened token ids.
    w_hbm   : (V, D) weight table left in HBM (memory_space=pl.ANY).
    out_ref : (tb, D) dense VMEM output block; rows land here directly via DMA.
    sems    : (ring,) DMA semaphores - `ring` row fetches kept in flight.
    """
    base = pl.program_id(0) * tb

    def start_copy(t):
        row = idx_ref[base + t]
        pltpu.make_async_copy(
            w_hbm.at[pl.ds(row, 1), :],
            out_ref.at[pl.ds(t, 1), :],
            sems.at[t % ring],
        ).start()

    def wait_copy(t):
        # wait() only uses the semaphore + transfer size; source row is irrelevant.
        pltpu.make_async_copy(
            w_hbm.at[pl.ds(0, 1), :],
            out_ref.at[pl.ds(t, 1), :],
            sems.at[t % ring],
        ).wait()

    # Prime the ring with the first `ring` row fetches.
    @pl.loop(0, min(ring, tb))
    def _(t):
        start_copy(t)

    # Wait in order; refill the freed slot so `ring` DMAs stay outstanding.
    @pl.loop(0, tb)
    def _(t):
        wait_copy(t)

        @pl.when(t + ring < tb)
        def _():
            start_copy(t + ring)


def parallel_embedding(x, weight, *, tokens_per_block=256, dma_ring=8):
    """x: int [B, S] token indices; weight: [V, D]; returns [B, S, D]."""
    B, S = x.shape
    V, D = weight.shape
    N = B * S
    itemsize = jnp.dtype(weight.dtype).itemsize

    # Sublane-dense token block; keep it modest so 2x (tb, D) output buffers fit
    # every generation's VMEM budget (v7x 64 MiB phys / v5e 16 MiB default scope).
    sub = _sublane_rows(weight.dtype)
    tb = min(max(tokens_per_block, sub), _round_up(N, sub))
    tb = _round_up(tb, sub)
    n_pad = _round_up(N, tb)
    num_blocks = n_pad // tb
    ring = max(1, min(dma_ring, tb))

    # TODO(synk): PyTorch F.embedding raises on out-of-range ids; we clamp so the
    # data-dependent DMA never reads OOB (bad ids silently map to row 0 / V-1).
    idx = jnp.clip(x.reshape(N).astype(jnp.int32), 0, V - 1)
    if n_pad != N:
        # Padded tokens gather row 0 and are sliced off below.
        idx = jnp.pad(idx, (0, n_pad - N))

    # TODO(synk): for very large N (long-context prefill) the whole-idx scalar
    # prefetch should become a per-block SMEM input to bound SMEM footprint.
    # TODO(synk): if D is ever not a multiple of 128, pad the embedding dim for
    # lane-dense stores instead of relying on masked lane writes.

    kernel = functools.partial(_embed_gather_kernel, tb=tb, ring=ring)

    out = pl.pallas_call(
        kernel,
        out_shape=jax.ShapeDtypeStruct((n_pad, D), weight.dtype),
        grid_spec=pltpu.PrefetchScalarGridSpec(
            num_scalar_prefetch=1,          # token ids land in SMEM before the grid runs
            grid=(num_blocks,),             # one token block per grid step
            in_specs=[
                pl.BlockSpec(memory_space=pl.ANY),  # weight stays in HBM; rows DMA'd manually
            ],
            out_specs=pl.BlockSpec((tb, D), lambda i, idx_ref: (i, 0)),
            scratch_shapes=[pltpu.SemaphoreType.DMA((ring,))],
        ),
        compiler_params=pltpu.CompilerParams(
            # Token blocks are independent; on v7x this shards the grid across both TCs.
            dimension_semantics=("parallel",),
            vmem_limit_bytes=32 * 1024 * 1024,
        ),
        cost_estimate=pl.CostEstimate(
            flops=0,
            transcendentals=0,
            bytes_accessed=2 * N * D * itemsize + n_pad * 4,
        ),
    )(idx, weight)

    return out[:N].reshape(B, S, D)


if __name__ == "__main__":
    # Module hyper-params (small, consistent with the forward semantics)
    vocab_size = 256
    dim = 128
    batch, seq = 2, 8

    key = jax.random.PRNGKey(0)
    k_w, k_x = jax.random.split(key)

    # Deterministic parameter init (nn.Parameter(torch.empty(V, D)) -> synthetic init)
    weight = jax.random.normal(k_w, (vocab_size, dim), dtype=jnp.float32) * 0.02
    x = jax.random.randint(k_x, (batch, seq), 0, vocab_size, dtype=jnp.int32)

    # tokens_per_block=8 -> 2 token blocks, exercising the multi-step grid path.
    y = parallel_embedding(x, weight, tokens_per_block=8, dma_ring=8)
    y = jax.block_until_ready(y)

    # Reference check: plain gather. DMA row gather is exact (no matmul), so
    # require bitwise equality.
    y_ref = jnp.take(weight, x, axis=0)
    assert y.shape == (batch, seq, dim)
    assert bool(jnp.array_equal(y, y_ref)), "mismatch vs reference embedding gather"

    print("KERNEL_OK")
</pallas_src>

<mosaic_0001>
module attributes {stable_mosaic.version = 11 : i64} {
  func.func @_embed_gather_kernel(%arg0: i32, %arg1: memref<16xi32, #tpu.memory_space<smem>>, %arg2: memref<256x128xf32, #tpu.memory_space<any>>, %arg3: memref<8x128xf32, #tpu.memory_space<vmem>>, %arg4: memref<8x!tpu.dma_semaphore, #tpu.memory_space<semaphore_mem>>) attributes {dimension_semantics = [#tpu.dimension_semantics<parallel>], iteration_bounds = array<i64: 2>, scalar_prefetch = 1 : i64, scratch_operands = 1 : i64, tpu.core_type = #tpu.core_type<tc>, window_params = [{}, {transform_indices = @transform_1, window_bounds = array<i64: 8, 128>}]} {
    %c8_i32 = arith.constant 8 : i32
    %0 = arith.muli %arg0, %c8_i32 : i32
    %c0_i32 = arith.constant 0 : i32
    %c8_i32_0 = arith.constant 8 : i32
    %1 = arith.addi %c0_i32, %c8_i32_0 : i32
    %c1_i32 = arith.constant 1 : i32
    scf.for %arg5 = %c0_i32 to %1 step %c1_i32  : i32 {
      %c1_i32_6 = arith.constant 1 : i32
      %3 = arith.muli %arg5, %c1_i32_6 : i32
      %c0_i32_7 = arith.constant 0 : i32
      %4 = arith.addi %c0_i32_7, %3 : i32
      %5 = arith.addi %0, %4 : i32
      %6 = arith.index_cast %5 : i32 to index
      %7 = memref.load %arg1[%6] : memref<16xi32, #tpu.memory_space<smem>>
      %c8_i32_8 = arith.constant 8 : i32
      %c0_i32_9 = arith.constant 0 : i32
      %8 = arith.cmpi eq, %c8_i32_8, %c0_i32_9 : i32
      %c1_i32_10 = arith.constant 1 : i32
      %9 = arith.select %8, %c1_i32_10, %c8_i32_8 : i32
      %10 = arith.remsi %4, %9 : i32
      %c0_i32_11 = arith.constant 0 : i32
      %11 = arith.cmpi ne, %10, %c0_i32_11 : i32
      %c0_i32_12 = arith.constant 0 : i32
      %12 = arith.cmpi slt, %10, %c0_i32_12 : i32
      %c0_i32_13 = arith.constant 0 : i32
      %13 = arith.cmpi slt, %9, %c0_i32_13 : i32
      %14 = arith.xori %12, %13 : i1
      %15 = arith.andi %14, %11 : i1
      %16 = arith.addi %10, %9 : i32
      %17 = arith.select %15, %16, %10 : i32
      %c0_i32_14 = arith.constant 0 : i32
      %18 = tpu.memref_slice %arg2[%7, %c0_i32_14] : memref<256x128xf32, #tpu.memory_space<any>> -> memref<1x128xf32, #tpu.memory_space<any>>
      %c0_i32_15 = arith.constant 0 : i32
      %19 = tpu.memref_slice %arg3[%4, %c0_i32_15] : memref<8x128xf32, #tpu.memory_space<vmem>> -> memref<1x128xf32, #tpu.memory_space<vmem>>
      %20 = tpu.memref_slice %arg4[%17] : memref<8x!tpu.dma_semaphore, #tpu.memory_space<semaphore_mem>> -> memref<1x!tpu.dma_semaphore, #tpu.memory_space<semaphore_mem>>
      %21 = tpu.memref_squeeze %20 : memref<1x!tpu.dma_semaphore, #tpu.memory_space<semaphore_mem>> -> memref<!tpu.dma_semaphore, #tpu.memory_space<semaphore_mem>>
      tpu.enqueue_dma source(%18 : memref<1x128xf32, #tpu.memory_space<any>>) target(%19 : memref<1x128xf32, #tpu.memory_space<vmem>>) target_semaphore(%21 : memref<!tpu.dma_semaphore, #tpu.memory_space<semaphore_mem>>)
    }
    %c8_i32_1 = arith.constant 8 : i32
    %c0_i32_2 = arith.constant 0 : i32
    %c8_i32_3 = arith.constant 8 : i32
    %2 = arith.addi %c0_i32_2, %c8_i32_3 : i32
    %c1_i32_4 = arith.constant 1 : i32
    scf.for %arg5 = %c0_i32_2 to %2 step %c1_i32_4  : i32 {
      %c1_i32_6 = arith.constant 1 : i32
      %3 = arith.muli %arg5, %c1_i32_6 : i32
      %c0_i32_7 = arith.constant 0 : i32
      %4 = arith.addi %c0_i32_7, %3 : i32
      %c8_i32_8 = arith.constant 8 : i32
      %c0_i32_9 = arith.constant 0 : i32
      %5 = arith.cmpi eq, %c8_i32_8, %c0_i32_9 : i32
      %c1_i32_10 = arith.constant 1 : i32
      %6 = arith.select %5, %c1_i32_10, %c8_i32_8 : i32
      %7 = arith.remsi %4, %6 : i32
      %c0_i32_11 = arith.constant 0 : i32
      %8 = arith.cmpi ne, %7, %c0_i32_11 : i32
      %c0_i32_12 = arith.constant 0 : i32
      %9 = arith.cmpi slt, %7, %c0_i32_12 : i32
      %c0_i32_13 = arith.constant 0 : i32
      %10 = arith.cmpi slt, %6, %c0_i32_13 : i32
      %11 = arith.xori %9, %10 : i1
      %12 = arith.andi %11, %8 : i1
      %13 = arith.addi %7, %6 : i32
      %14 = arith.select %12, %13, %7 : i32
      %c0_i32_14 = arith.constant 0 : i32
      %c0_i32_15 = arith.constant 0 : i32
      %15 = tpu.memref_slice %arg2[%c0_i32_14, %c0_i32_15] : memref<256x128xf32, #tpu.memory_space<any>> -> memref<1x128xf32, #tpu.memory_space<any>>
      %c0_i32_16 = arith.constant 0 : i32
      %16 = tpu.memref_slice %arg3[%4, %c0_i32_16] : memref<8x128xf32, #tpu.memory_space<vmem>> -> memref<1x128xf32, #tpu.memory_space<vmem>>
      %17 = tpu.memref_slice %arg4[%14] : memref<8x!tpu.dma_semaphore, #tpu.memory_space<semaphore_mem>> -> memref<1x!tpu.dma_semaphore, #tpu.memory_space<semaphore_mem>>
      %18 = tpu.memref_squeeze %17 : memref<1x!tpu.dma_semaphore, #tpu.memory_space<semaphore_mem>> -> memref<!tpu.dma_semaphore, #tpu.memory_space<semaphore_mem>>
      tpu.wait_dma2 semaphore(%18 : memref<!tpu.dma_semaphore, #tpu.memory_space<semaphore_mem>>) src(%15 : memref<1x128xf32, #tpu.memory_space<any>>) dst(%16 : memref<1x128xf32, #tpu.memory_space<vmem>>)
      %c8_i32_17 = arith.constant 8 : i32
      %19 = arith.addi %4, %c8_i32_17 : i32
      %c8_i32_18 = arith.constant 8 : i32
      %20 = arith.cmpi slt, %19, %c8_i32_18 : i32
      %21 = arith.extui %20 : i1 to i32
      %c0_i32_19 = arith.constant 0 : i32
      %22 = arith.cmpi ne, %21, %c0_i32_19 : i32
      scf.if %22 {
        %c8_i32_20 = arith.constant 8 : i32
        %23 = arith.addi %4, %c8_i32_20 : i32
        %24 = arith.addi %0, %23 : i32
        %25 = arith.index_cast %24 : i32 to index
        %26 = memref.load %arg1[%25] : memref<16xi32, #tpu.memory_space<smem>>
        %c8_i32_21 = arith.constant 8 : i32
        %c0_i32_22 = arith.constant 0 : i32
        %27 = arith.cmpi eq, %c8_i32_21, %c0_i32_22 : i32
        %c1_i32_23 = arith.constant 1 : i32
        %28 = arith.select %27, %c1_i32_23, %c8_i32_21 : i32
        %29 = arith.remsi %23, %28 : i32
        %c0_i32_24 = arith.constant 0 : i32
        %30 = arith.cmpi ne, %29, %c0_i32_24 : i32
        %c0_i32_25 = arith.constant 0 : i32
        %31 = arith.cmpi slt, %29, %c0_i32_25 : i32
        %c0_i32_26 = arith.constant 0 : i32
        %32 = arith.cmpi slt, %28, %c0_i32_26 : i32
        %33 = arith.xori %31, %32 : i1
        %34 = arith.andi %33, %30 : i1
        %35 = arith.addi %29, %28 : i32
        %36 = arith.select %34, %35, %29 : i32
        %c0_i32_27 = arith.constant 0 : i32
        %37 = tpu.memref_slice %arg2[%26, %c0_i32_27] : memref<256x128xf32, #tpu.memory_space<any>> -> memref<1x128xf32, #tpu.memory_space<any>>
        %c0_i32_28 = arith.constant 0 : i32
        %38 = tpu.memref_slice %arg3[%23, %c0_i32_28] : memref<8x128xf32, #tpu.memory_space<vmem>> -> memref<1x128xf32, #tpu.memory_space<vmem>>
        %39 = tpu.memref_slice %arg4[%36] : memref<8x!tpu.dma_semaphore, #tpu.memory_space<semaphore_mem>> -> memref<1x!tpu.dma_semaphore, #tpu.memory_space<semaphore_mem>>
        %40 = tpu.memref_squeeze %39 : memref<1x!tpu.dma_semaphore, #tpu.memory_space<semaphore_mem>> -> memref<!tpu.dma_semaphore, #tpu.memory_space<semaphore_mem>>
        tpu.enqueue_dma source(%37 : memref<1x128xf32, #tpu.memory_space<any>>) target(%38 : memref<1x128xf32, #tpu.memory_space<vmem>>) target_semaphore(%40 : memref<!tpu.dma_semaphore, #tpu.memory_space<semaphore_mem>>)
      } else {
      }
    }
    %c8_i32_5 = arith.constant 8 : i32
    return
  }
  func.func @transform_1(%arg0: i32, %arg1: memref<16xi32, #tpu.memory_space<smem>>) -> (i32, i32) {
    %c0_i32 = arith.constant 0 : i32
    %c0_i32_0 = arith.constant 0 : i32
    return %arg0, %c0_i32 : i32, i32
  }
}

</mosaic_0001>

<llo_original>
// kernel: tpu_custom_call.1
$region0: #{tpu_custom_call.1}
  #allocation0 [shape = 'u32[]', space=smem, size = 0x4, offset = 0x4, fixed_abs, tag = 'smem constant byte address 0x4 - core index']
  #allocation1 [shape = 'u32[144,128]{1,0:T(1,128)}', space=vmem, size = 0x12000, scoped, tag = 'internal scratch']
  #allocation2 [shape = 's32[8]{0}', space=sflag, size = 0x20, scoped, tag = 'scratch operand']
  #allocation3 [shape = 's32[1]{0}', space=sflag, size = 0x4, scoped, tag = 'scoped memory for tpu_custom_call.1']
  #allocation4 [shape = 'u8[512]{0}', space=smem, size = 0x200, scoped, tag = 'prefetched SMEM operand 0']
  #allocation7 [shape = 's32[]', space=sflag, size = 0x4, offset = 0, fixed_abs, tag = 'sflag constant byte address 0x0 - dummy sync flag']
  #allocation8 [shape = 's32[]', space=sflag, size = 0x4, offset = 0, fixed_abs, tag = 'sflag constant byte address 0x0 - dummy sync flag']
  #allocation9 [shape = 'u32[]', space=smem, size = 0x4, offset = 0x44, fixed_abs, tag = 'smem constant byte address 0x44 - assertion arg 0']
  #allocation10 [shape = 'u32[]', space=smem, size = 0x4, offset = 0x48, fixed_abs, tag = 'smem constant byte address 0x48 - assertion arg 1']
  #allocation11 [shape = 's32[]', space=sflag, size = 0x4, offset = 0, fixed_abs, tag = 'sflag constant byte address 0x0 - dummy sync flag']
  #allocation12 [shape = 's32[]', space=sflag, size = 0x4, offset = 0, fixed_abs, tag = 'sflag constant byte address 0x0 - dummy sync flag']
  %s0 = inlined_call_operand.hbm [shape: s32[16], index: 0, kind: input, shape index: {}]
  %s1 = inlined_call_operand.hbm [shape: f32[256,128], index: 1, kind: input, shape index: {}]
  %s2 = inlined_call_operand.hbm [shape: f32[16,128], index: 2, kind: output, shape index: {}]
  %s3 = sld [smem:[#allocation0]]
  $region51: #{tpu_custom_call.1} parent=0
    _
  %s5 = ssub.s32 1, %s3
  %s6 = scalar_select 0, %s5, %s3
  %8 = dma.hbm_to_smem %s0, 16, [#allocation4], [#allocation3]
  %9 = dma.done [#allocation3], 16
  %10 = sfence
  $region1: #{tpu_custom_call.1} parent=0
    #allocation5 [shape = 'u8[8192]{0}', space=vmem, size = 0x2000, scoped, tag = 'output window, operand 0']
    #allocation6 [shape = 's32[2]{0}', space=sflag, size = 0x8, scoped, tag = 'scoped memory for tpu_custom_call.1']
    %11 = vsyncpa [#allocation6], 0
    %s12 = scalar_lea.sflag [#allocation6], 1
    %13 = vsyncpa %s12, 0
    loop: start=0, step=1, limit=3
    $region2: #{tpu_custom_call.1} parent=1 // loop_pre_header
      _
    $region3: #{tpu_custom_call.1} parent=1 // loop_header
      %s15 = sphi 0, %s19
      %p16 = scmp.ge.s32.totalorder %s15, 3
      %s24 = sphi 0, %s26
      %s27 = sphi 0, %s24
      %s37 = sphi 0, %s27
    $region4: #{tpu_custom_call.1} parent=1 // loop_header_branch
      %18 = sbr.rel (%p16) target = $region8
    $region5: #{tpu_custom_call.1} parent=1 // loop_body
      %s20 = ssub.s32 %s15, 1
      %s21 = sadd.s32 %s15, 1
      %s22 = ssub.s32 %s15, %s21
      %p23 = scmp.eq.s32.totalorder %s22, 0
      %s25 = sadd.s32 %s24, 1
      %s26 = scalar_select %p23, %s24, %s25
      %p28 = pneg %p23
      %p29 = scmp.eq.s32.totalorder %s15, 1
      %p30 = por %p28, %p29
      %p31 = scmp.ne.s32.totalorder %s24, %s27
      %p32 = scmp.eq.s32.totalorder %s15, 0
      %p33 = por %p31, %p32
      %p34 = scmp.ne.s32.totalorder %s24, %s27
      %p35 = scmp.eq.s32.totalorder %s20, 1
      %p36 = por %p34, %p35
      %p38 = scmp.ne.s32.totalorder %s27, %s37
      %p39 = scmp.eq.s32.totalorder %s20, 0
      %p40 = por %p38, %p39
      %p41 = scmp.lt.s32.totalorder %s15, 2
      // Predicated region
      $region9: #{tpu_custom_call.1} parent=5 // pred_check
        %p42 = pneg %p41
      $region10: #{tpu_custom_call.1} parent=5 // pred_check_branch
        %44 = sbr.rel (%p42) target = $region12
      $region11: #{tpu_custom_call.1} parent=5 // pred_region
        %p45 = pneg %p33
        %p46 = pneg %p30
        %s47 = sand.u32 %s24, 1
        %s48 = scalar_lea.sflag [#allocation6], %s47
        %s49 = sand.u32 %s24, 1
        %s50 = smul.addr %s49, 8
        %s51 = scalar_lea.vmem [#allocation5], %s50
        %s52 = smul.u32 %s15, 8
        loop: start=0, step=1, limit=8
        $region13: #{tpu_custom_call.1} parent=11 // loop_pre_header
          _
        $region14: #{tpu_custom_call.1} parent=11 // loop_header
          %s54 = sphi 0, %s58
          %p55 = scmp.ge.s32.totalorder %s54, 8
        $region15: #{tpu_custom_call.1} parent=11 // loop_header_branch
          %57 = sbr.rel (%p55) target = $region19
        $region16: #{tpu_custom_call.1} parent=11 // loop_body
          %s59 = sadd.s32 %s52, %s54
          %s60 = sld [smem:[#allocation4 + %s59]]
          %p61 = scmp.lt.s32.totalorder %s54, 0
          %s62 = ssub.s32 0, %s54
          %s63 = scalar_select %p61, %s62, %s54
          %s64 = sand.u32 %s63, 7
          %s65 = ssub.s32 0, %s64
          %s66 = scalar_select %p61, %s65, %s64
          %p67 = scmp.ne.s32.totalorder %s66, 0
          %p68 = scmp.lt.s32.totalorder %s66, 0
          %p69 = pnand %p68, %p67
          %p70 = pneg %p69
          %s71 = sadd.s32 %s66, 8
          %s72 = scalar_select %p70, %s71, %s66
          %s73 = smul.addr %s60, 16
          %s74 = scalar_lea.hbm %s1, %s73
          %s75 = scalar_lea.vmem %s51, %s54 [#allocation5]
          %s76 = scalar_lea.sflag [#allocation2], %s72
          // Predicated region
          $region20: #{tpu_custom_call.1} parent=16 // pred_check
            _
          $region21: #{tpu_custom_call.1} parent=16 // pred_check_branch
            %78 = sbr.rel target = $region23
          $region22: #{tpu_custom_call.1} parent=16 // pred_region
            %79 = sst [smem:[#allocation9]] [#allocation8]
            %80 = sst [smem:[#allocation10]] [#allocation7]
          $region23: #{tpu_custom_call.1} parent=16 // pred_fallthru
            _
          %82 = shalt.err (0)
          %s84 = sshll.u32 %s75, 4
          %s85 = int_to_ptr.vmem [resolvable:$true] %s84
          %87 = dma.hbm_to_vmem [thread:$0]  %s74, 16, %s85, %s76
        $region17: #{tpu_custom_call.1} parent=11 // loop_footer
          %s58 = sadd.s32 1, %s54
        $region18: #{tpu_custom_call.1} parent=11 // loop_footer_branch
          %53 = sbr.rel target = $region14
        $region19: #{tpu_custom_call.1} parent=11 // loop_exit
          _
        loop: start=0, step=1, limit=8
        $region24: #{tpu_custom_call.1} parent=11 // loop_pre_header
          _
        $region25: #{tpu_custom_call.1} parent=11 // loop_header
          %s89 = sphi 0, %s93
          %p90 = scmp.ge.s32.totalorder %s89, 8
        $region26: #{tpu_custom_call.1} parent=11 // loop_header_branch
          %92 = sbr.rel (%p90) target = $region30
        $region27: #{tpu_custom_call.1} parent=11 // loop_body
          %p94 = scmp.lt.s32.totalorder %s89, 0
          %s95 = ssub.s32 0, %s89
          %s96 = scalar_select %p94, %s95, %s89
          %s97 = sand.u32 %s96, 7
          %s98 = ssub.s32 0, %s97
          %s99 = scalar_select %p94, %s98, %s97
          %p100 = scmp.ne.s32.totalorder %s99, 0
          %p101 = scmp.lt.s32.totalorder %s99, 0
          %p102 = pnand %p101, %p100
          %p103 = pneg %p102
          %s104 = sadd.s32 %s99, 8
          %s105 = scalar_select %p103, %s104, %s99
          %s106 = scalar_lea.sflag [#allocation2], %s105
          %s107 = smul.u32 1, 1
          %s108 = sshll.u32 %s107, 4
          %109 = dma.done %s106, %s108
          %s110 = sadd.s32 %s89, 8
          %p111 = scmp.lt.s32.totalorder %s110, 8
          // Predicated region
          $region31: #{tpu_custom_call.1} parent=27 // pred_check
            %p112 = pneg %p111
          $region32: #{tpu_custom_call.1} parent=27 // pred_check_branch
            %114 = sbr.rel (%p112) target = $region34
          $region33: #{tpu_custom_call.1} parent=27 // pred_region
            %s115 = sadd.s32 %s52, %s110
            %s116 = sld [smem:[#allocation4 + %s115]]
            %p117 = scmp.lt.s32.totalorder %s110, 0
            %s118 = ssub.s32 0, %s110
            %s119 = scalar_select %p117, %s118, %s110
            %s120 = sand.u32 %s119, 7
            %s121 = ssub.s32 0, %s120
            %s122 = scalar_select %p117, %s121, %s120
            %p123 = scmp.ne.s32.totalorder %s122, 0
            %p124 = scmp.lt.s32.totalorder %s122, 0
            %p125 = pnand %p124, %p123
            %p126 = pneg %p125
            %s127 = sadd.s32 %s122, 8
            %s128 = scalar_select %p126, %s127, %s122
            %s129 = smul.addr %s116, 16
            %s130 = scalar_lea.hbm %s1, %s129
            %s131 = scalar_lea.vmem %s51, %s110 [#allocation5]
            %s132 = scalar_lea.sflag [#allocation2], %s128
            // Predicated region
            $region35: #{tpu_custom_call.1} parent=33 // pred_check
              _
            $region36: #{tpu_custom_call.1} parent=33 // pred_check_branch
              %134 = sbr.rel target = $region38
            $region37: #{tpu_custom_call.1} parent=33 // pred_region
              %135 = sst [smem:[#allocation9]] [#allocation12]
              %136 = sst [smem:[#allocation10]] [#allocation11]
            $region38: #{tpu_custom_call.1} parent=33 // pred_fallthru
              _
            %138 = shalt.err (0)
            %s140 = sshll.u32 %s131, 4
            %s141 = int_to_ptr.vmem [resolvable:$true] %s140
            %143 = dma.hbm_to_vmem [thread:$0]  %s130, 16, %s141, %s132
          $region34: #{tpu_custom_call.1} parent=27 // pred_fallthru
            _
        $region28: #{tpu_custom_call.1} parent=11 // loop_footer
          %s93 = sadd.s32 1, %s89
        $region29: #{tpu_custom_call.1} parent=11 // loop_footer_branch
          %88 = sbr.rel target = $region25
        $region30: #{tpu_custom_call.1} parent=11 // loop_exit
          _
        %s144 = sand.u32 %s24, 1
        %s145 = scalar_lea.sflag [#allocation6], %s144
        %s146 = sand.u32 %s24, 1
        %s147 = smul.addr %s146, 8
        %s148 = scalar_lea.vmem [#allocation5], %s147
        // Predicated region
        $region39: #{tpu_custom_call.1} parent=11 // pred_check
          %p149 = pneg %p30
        $region40: #{tpu_custom_call.1} parent=11 // pred_check_branch
          %151 = sbr.rel (%p149) target = $region42
        $region41: #{tpu_custom_call.1} parent=11 // pred_region
          %s153 = ssub.s32 128, 128
          %154 = vsyncadd %s145, %s153
          %s155 = smul.addr %s15, 128
          %s156 = scalar_lea.hbm %s2, %s155
          %s158 = sshll.u32 %s148, 4
          %s159 = int_to_ptr.vmem [resolvable:$true] %s158
          %161 = dma.vmem_to_hbm [thread:$0]  %s159, 128, %s156, %s145
        $region42: #{tpu_custom_call.1} parent=11 // pred_fallthru
          _
      $region12: #{tpu_custom_call.1} parent=5 // pred_fallthru
        _
      %p162 = scmp.le.s32.totalorder 1, %s15
      // Predicated region
      $region43: #{tpu_custom_call.1} parent=5 // pred_check
        %p163 = pneg %p162
      $region44: #{tpu_custom_call.1} parent=5 // pred_check_branch
        %165 = sbr.rel (%p163) target = $region46
      $region45: #{tpu_custom_call.1} parent=5 // pred_region
        %s166 = ssub.s32 %s15, 1
        // Predicated region
        $region47: #{tpu_custom_call.1} parent=45 // pred_check
          %p167 = pneg %p36
        $region48: #{tpu_custom_call.1} parent=45 // pred_check_branch
          %169 = sbr.rel (%p167) target = $region50
        $region49: #{tpu_custom_call.1} parent=45 // pred_region
          %s170 = sand.u32 %s27, 1
          %s171 = scalar_lea.sflag [#allocation6], %s170
          %s172 = sand.u32 %s27, 1
          %s173 = smul.addr %s172, 8
          %s174 = scalar_lea.vmem [#allocation5], %s173
          %175 = dma.done %s171, 128
        $region50: #{tpu_custom_call.1} parent=45 // pred_fallthru
          _
      $region46: #{tpu_custom_call.1} parent=5 // pred_fallthru
        _
    $region6: #{tpu_custom_call.1} parent=1 // loop_footer
      %s19 = sadd.s32 1, %s15
    $region7: #{tpu_custom_call.1} parent=1 // loop_footer_branch
      %14 = sbr.rel target = $region3
    $region8: #{tpu_custom_call.1} parent=1 // loop_exit
      _
    %176 = vsyncpa [#allocation6], 1
    %s177 = scalar_lea.sflag [#allocation6], 1
    %178 = vsyncpa %s177, 1
  %179 = vsyncmov [#allocation2]
  %s180 = vpop.sfrf %179
  %p181 = scmp.eq.s32.totalorder %s180, 0
  %p182 = pneg %p181
  %184 = shalt.err (%p182)
  %s185 = scalar_lea.sflag [#allocation2], 1
  %186 = vsyncmov %s185
  %s187 = vpop.sfrf %186
  %p188 = scmp.eq.s32.totalorder %s187, 0
  %p189 = pneg %p188
  %191 = shalt.err (%p189)
  %s192 = scalar_lea.sflag [#allocation2], 2
  %193 = vsyncmov %s192
  %s194 = vpop.sfrf %193
  %p195 = scmp.eq.s32.totalorder %s194, 0
  %p196 = pneg %p195
  %198 = shalt.err (%p196)
  %s199 = scalar_lea.sflag [#allocation2], 3
  %200 = vsyncmov %s199
  %s201 = vpop.sfrf %200
  %p202 = scmp.eq.s32.totalorder %s201, 0
  %p203 = pneg %p202
  %205 = shalt.err (%p203)
  %s206 = scalar_lea.sflag [#allocation2], 4
  %207 = vsyncmov %s206
  %s208 = vpop.sfrf %207
  %p209 = scmp.eq.s32.totalorder %s208, 0
  %p210 = pneg %p209
  %212 = shalt.err (%p210)
  %s213 = scalar_lea.sflag [#allocation2], 5
  %214 = vsyncmov %s213
  %s215 = vpop.sfrf %214
  %p216 = scmp.eq.s32.totalorder %s215, 0
  %p217 = pneg %p216
  %219 = shalt.err (%p217)
  %s220 = scalar_lea.sflag [#allocation2], 6
  %221 = vsyncmov %s220
  %s222 = vpop.sfrf %221
  %p223 = scmp.eq.s32.totalorder %s222, 0
  %p224 = pneg %p223
  %226 = shalt.err (%p224)
  %s227 = scalar_lea.sflag [#allocation2], 7
  %228 = vsyncmov %s227
  %s229 = vpop.sfrf %228
  %p230 = scmp.eq.s32.totalorder %s229, 0
  %p231 = pneg %p230
  %233 = shalt.err (%p231)

</llo_original>
